<compile_context>
chip_gen: v6e
topology: v6e:2x2x1
jax: 0.10.0
libtpu: 0.0.40
codegen_flags: <defaults>
</compile_context>

<pallas_src>
import functools
import math

import jax
import jax.numpy as jnp
from jax.experimental import pallas as pl
from jax.experimental.pallas import tpu as pltpu

LANE = 128
SUBLANE = 8
_VMEM_TARGET_BYTES = 48 * 1024 * 1024   # keep working set comfortably under v7x's 64 MiB
_VMEM_LIMIT_CAP = 62 * 1024 * 1024      # never request more than physical v7x VMEM


def _round_up(x, m):
    return ((x + m - 1) // m) * m


# ----------------------------------------------------------------------------
# Fused kernel: out[:, j-tile] = maybe_relu( relu(x @ W_t + b_t) @ W_blk[:, j-tile] + b_blk )
# Grid = (batch tiles i [parallel], output-column tiles j [arbitrary]).
# ----------------------------------------------------------------------------
def _fused_decoder_kernel(x_ref, wt_ref, bt_ref, wb_ref, bb_ref, o_ref, ys_ref, *,
                          final_relu: bool):
    # Matmul 1 runs once per batch tile (j == 0); its ReLU'd result is staged in a bf16
    # VMEM scratch and reused for every output-column tile j of the same batch tile.
    @pl.when(pl.program_id(1) == 0)
    def _():
        x = x_ref[...].astype(jnp.bfloat16)                       # bf16 MXU operands
        ys = jnp.dot(x, wt_ref[...], preferred_element_type=jnp.float32)
        ys = jnp.maximum(ys + bt_ref[...], 0.0)                   # f32 bias + ReLU
        ys_ref[...] = ys.astype(ys_ref.dtype)                     # bf16 staging

    out = jnp.dot(ys_ref[...], wb_ref[...], preferred_element_type=jnp.float32)
    out = out + bb_ref[...]
    if final_relu:
        out = jnp.maximum(out, 0.0)
    o_ref[...] = out.astype(o_ref.dtype)


def fused_sparse_decoder(x_p, wt_p, bt_p, wb_p, bb_p, *, final_relu, tm, tn,
                         single_buffer_weights, vmem_limit_bytes, cost_estimate):
    """x_p: (bp, d_reduced).  Weights lane-dense/padded; W_blk block-diagonal packed.
    Returns padded output (bp, d_out_p)."""
    bp, d_in = x_p.shape
    d_ci_p = wt_p.shape[1]
    d_out_p = wb_p.shape[1]
    assert bp % tm == 0 and d_out_p % tn == 0

    kernel = functools.partial(_fused_decoder_kernel, final_relu=final_relu)
    # W_t / b_t have constant index maps -> single buffer is enough (saves VMEM).
    wkw = {"pipeline_mode": pl.Buffered(1)} if single_buffer_weights else {}

    return pl.pallas_call(
        kernel,
        out_shape=jax.ShapeDtypeStruct((bp, d_out_p), x_p.dtype),
        grid_spec=pltpu.PrefetchScalarGridSpec(
            num_scalar_prefetch=0,
            grid=(bp // tm, d_out_p // tn),
            in_specs=[
                pl.BlockSpec((tm, d_in), lambda i, j: (i, 0)),            # x tile (pipelined)
                pl.BlockSpec((d_in, d_ci_p), lambda i, j: (0, 0), **wkw),  # W_t  (bf16, pinned)
                pl.BlockSpec((1, d_ci_p), lambda i, j: (0, 0), **wkw),     # b_t  (f32,  pinned)
                pl.BlockSpec((d_ci_p, tn), lambda i, j: (0, j)),           # W_blk column slab
                pl.BlockSpec((1, tn), lambda i, j: (0, j)),                # b_blk column slab
            ],
            out_specs=pl.BlockSpec((tm, tn), lambda i, j: (i, j)),
            scratch_shapes=[pltpu.VMEM((tm, d_ci_p), jnp.bfloat16)],       # ys staging
        ),
        compiler_params=pltpu.CompilerParams(
            dimension_semantics=("parallel", "arbitrary"),
            vmem_limit_bytes=int(vmem_limit_bytes),
        ),
        cost_estimate=cost_estimate,
    )(x_p, wt_p, bt_p, wb_p, bb_p)


# ----------------------------------------------------------------------------
# Parameter init (mirrors torch.nn.Linear uniform +/- 1/sqrt(fan_in))
# ----------------------------------------------------------------------------
def init_linear_params(key, d_in, d_out, dtype=jnp.float32):
    kw, kb = jax.random.split(key)
    bound = 1.0 / math.sqrt(d_in)
    w = jax.random.uniform(kw, (d_out, d_in), dtype, minval=-bound, maxval=bound)
    b = jax.random.uniform(kb, (d_out,), dtype, minval=-bound, maxval=bound)
    return w.T, b  # (d_in, d_out), (d_out,)


class SparseDecoderPallas:
    def __init__(self, key, d_reduced, d_intrs, d_outs, param_dtype=jnp.bfloat16):
        assert len(d_intrs) == len(d_outs)
        self.d_reduced = int(d_reduced)
        self.d_intrs = [int(d) for d in d_intrs]
        self.d_outs = [int(d) for d in d_outs]
        self.d_concat_intrs = int(sum(self.d_intrs))
        self.d_concat_outs = int(sum(self.d_outs))
        self.param_dtype = param_dtype          # MXU-native storage for the matmul weights
        self._single_buffer_weights = True      # flipped off once if pl.Buffered(1) rejected

        # Lane-dense padded feature dims for the two weight matrices / output.
        self.d_ci_p = _round_up(self.d_concat_intrs, LANE)
        self.d_out_p = _round_up(self.d_concat_outs, LANE)

        keys = jax.random.split(key, len(d_outs) + 1)
        # Master f32 parameters (used by the references).
        self.w_t, self.b_t = init_linear_params(keys[0], self.d_reduced,
                                                self.d_concat_intrs, jnp.float32)
        self.block_params = [
            init_linear_params(keys[i + 1], d_intr, d_out, jnp.float32)
            for i, (d_intr, d_out) in enumerate(zip(self.d_intrs, self.d_outs))
        ]

        # Packed kernel parameters: weights in param_dtype (bf16), biases in f32.
        wt_p = jnp.zeros((self.d_reduced, self.d_ci_p), self.param_dtype)
        self.wt_p = wt_p.at[:, :self.d_concat_intrs].set(self.w_t.astype(self.param_dtype))
        bt_p = jnp.zeros((1, self.d_ci_p), jnp.float32)
        self.bt_p = bt_p.at[0, :self.d_concat_intrs].set(self.b_t)

        # Block-diagonal packing of the per-block linears (off-diagonal zeros => identical
        # to split -> per-block matmul -> concat).
        wb = jnp.zeros((self.d_ci_p, self.d_out_p), self.param_dtype)
        bb = jnp.zeros((1, self.d_out_p), jnp.float32)
        in_off, out_off = 0, 0
        for (w_i, b_i), d_intr, d_out in zip(self.block_params, self.d_intrs, self.d_outs):
            wb = wb.at[in_off:in_off + d_intr, out_off:out_off + d_out].set(
                w_i.astype(self.param_dtype))
            bb = bb.at[0, out_off:out_off + d_out].set(b_i)
            in_off += d_intr
            out_off += d_out
        self.wb_p = wb
        self.bb_p = bb
        # TODO(synk): for many/large blocks, replace the dense block-diagonal matmul with a
        # grid-over-blocks grouped matmul (PrefetchScalarGridSpec offset tables) so only the
        # sum(d_intr_i*d_out_i) non-zero MACs and bytes are spent.

    # ----- tiling / budget helpers ------------------------------------------
    def _pick_tn(self):
        if self.d_out_p <= 512:
            return self.d_out_p
        for cand in (512, 384, 256):
            if self.d_out_p % cand == 0:
                return cand
        return 128  # d_out_p is always a multiple of 128

    def _vmem_need(self, tm, tn):
        wbytes = jnp.dtype(self.param_dtype).itemsize
        wt = 2 * self.d_reduced * self.d_ci_p * wbytes   # budget as if double-buffered
        bt = 2 * self.d_ci_p * 4
        wb = 2 * self.d_ci_p * tn * wbytes               # double-buffered column slab
        bb = 2 * tn * 4
        x = 2 * tm * self.d_reduced * 4
        out = 2 * tm * tn * 4
        ys = tm * self.d_ci_p * 2
        return wt + bt + wb + bb + x + out + ys

    def _vmem_limit(self, tm, tn):
        need = self._vmem_need(tm, tn)
        return min(_VMEM_LIMIT_CAP, max(32 * 1024 * 1024, int(need * 1.75) + (2 << 20)))

    def _pick_tiles(self, batch):
        tn = self._pick_tn()
        bp8 = _round_up(max(batch, 1), SUBLANE)
        tm = min(512, bp8)
        # 2-TC chips (v7x): keep >=2 iterations on the parallel batch axis when the column
        # axis has a single tile and the batch is large enough to split.
        if (self.d_out_p // tn) < 2 and bp8 >= 2 * SUBLANE:
            tm = min(tm, _round_up((bp8 + 1) // 2, SUBLANE))
        # Shrink the batch tile until the working set fits the VMEM target.
        while self._vmem_need(tm, tn) > _VMEM_TARGET_BYTES and tm > SUBLANE:
            tm = max(SUBLANE, _round_up(tm // 2, SUBLANE))
        return tm, tn

    def _cost_estimate(self, batch):
        wbytes = jnp.dtype(self.param_dtype).itemsize
        block_macs = sum(di * do for di, do in zip(self.d_intrs, self.d_outs))
        flops = 2 * batch * (self.d_reduced * self.d_concat_intrs + block_macs)
        bytes_accessed = (4 * batch * self.d_reduced
                          + wbytes * self.d_reduced * self.d_concat_intrs
                          + 4 * self.d_concat_intrs
                          + wbytes * block_macs
                          + 4 * self.d_concat_outs
                          + 4 * batch * self.d_concat_outs)
        return pl.CostEstimate(flops=flops, transcendentals=0, bytes_accessed=bytes_accessed)

    # ----- forward ------------------------------------------------------------
    def forward(self, xs, relu=False):
        batch, d_in = xs.shape
        assert d_in == self.d_reduced
        tm, tn = self._pick_tiles(batch)
        bp = _round_up(_round_up(batch, SUBLANE), tm)
        x_p = xs if bp == batch else jnp.pad(xs, ((0, bp - batch), (0, 0)))

        kwargs = dict(final_relu=bool(relu), tm=tm, tn=tn,
                      vmem_limit_bytes=self._vmem_limit(tm, tn),
                      cost_estimate=self._cost_estimate(batch))
        try:
            out_p = fused_sparse_decoder(x_p, self.wt_p, self.bt_p, self.wb_p, self.bb_p,
                                         single_buffer_weights=self._single_buffer_weights,
                                         **kwargs)
            out_p = jax.block_until_ready(out_p)
        except Exception:
            if not self._single_buffer_weights:
                raise
            # TODO(synk): drop this fallback once pl.Buffered(1) on the top-level pipeline is
            # guaranteed by the minimum supported jax version.
            self._single_buffer_weights = False
            out_p = fused_sparse_decoder(x_p, self.wt_p, self.bt_p, self.wb_p, self.bb_p,
                                         single_buffer_weights=False, **kwargs)
            out_p = jax.block_until_ready(out_p)

        out = out_p
        if bp != batch:
            out = out[:batch]
        if self.d_out_p != self.d_concat_outs:
            out = out[:, :self.d_concat_outs]
        return out

    # Pure-JAX reference emulating the kernel arithmetic (bf16 operands, f32 accumulation).
    def forward_reference_bf16(self, xs, relu=False):
        x = xs.astype(jnp.bfloat16)
        wt = self.w_t.astype(jnp.bfloat16)
        ys = jnp.dot(x, wt, preferred_element_type=jnp.float32) + self.b_t
        ys = jnp.maximum(ys, 0.0).astype(jnp.bfloat16)
        outs, off = [], 0
        for (w_i, b_i), d_intr in zip(self.block_params, self.d_intrs):
            y = jnp.dot(ys[:, off:off + d_intr], w_i.astype(jnp.bfloat16),
                        preferred_element_type=jnp.float32) + b_i
            off += d_intr
            if relu:
                y = jnp.maximum(y, 0.0)
            outs.append(y)
        return jnp.concatenate(outs, axis=1)

    # Pure-f32 reference of the ORIGINAL module semantics.
    def forward_reference_f32(self, xs, relu=False):
        ys = jnp.maximum(xs @ self.w_t + self.b_t, 0.0)
        outs, off = [], 0
        for (w_i, b_i), d_intr in zip(self.block_params, self.d_intrs):
            y = ys[:, off:off + d_intr] @ w_i + b_i
            off += d_intr
            if relu:
                y = jnp.maximum(y, 0.0)
            outs.append(y)
        return jnp.concatenate(outs, axis=1)


if __name__ == "__main__":
    key = jax.random.PRNGKey(0)
    k_param, k_data = jax.random.split(key)

    batch = 8
    d_reduced = 32
    d_intrs = [16, 24, 8]
    d_outs = [32, 16, 48]

    model = SparseDecoderPallas(k_param, d_reduced, d_intrs, d_outs)
    xs = jax.random.normal(k_data, (batch, d_reduced), dtype=jnp.float32)

    out = jax.block_until_ready(model.forward(xs, relu=False))
    assert out.shape == (batch, sum(d_outs)), out.shape

    # Tight check against a reference that emulates the kernel's bf16/f32 arithmetic.
    ref_bf16 = model.forward_reference_bf16(xs, relu=False)
    assert jnp.allclose(out, ref_bf16, atol=2e-3, rtol=2e-3), \
        float(jnp.max(jnp.abs(out - ref_bf16)))
    # Loose semantic check against the pure-f32 PyTorch-equivalent reference.
    ref_f32 = model.forward_reference_f32(xs, relu=False)
    assert jnp.allclose(out, ref_f32, atol=1e-1, rtol=1e-1)

    # Also exercise the relu=True path.
    out_relu = jax.block_until_ready(model.forward(xs, relu=True))
    ref_relu = model.forward_reference_bf16(xs, relu=True)
    assert jnp.allclose(out_relu, ref_relu, atol=2e-3, rtol=2e-3)

    print("KERNEL_OK")
</pallas_src>

<mosaic_0001>
module attributes {stable_mosaic.version = 11 : i64} {
  func.func @_fused_decoder_kernel(%arg0: i32, %arg1: i32, %arg2: memref<8x32xf32, #tpu.memory_space<vmem>>, %arg3: memref<32x128xbf16, #tpu.memory_space<vmem>>, %arg4: memref<1x128xf32, #tpu.memory_space<vmem>>, %arg5: memref<128x128xbf16, #tpu.memory_space<vmem>>, %arg6: memref<1x128xf32, #tpu.memory_space<vmem>>, %arg7: memref<8x128xf32, #tpu.memory_space<vmem>>, %arg8: memref<8x128xbf16, #tpu.memory_space<vmem>>) attributes {dimension_semantics = [#tpu.dimension_semantics<parallel>, #tpu.dimension_semantics<arbitrary>], iteration_bounds = array<i64: 1, 1>, scalar_prefetch = 0 : i64, scratch_operands = 1 : i64, tpu.core_type = #tpu.core_type<tc>, window_params = [{transform_indices = @transform_0, window_bounds = array<i64: 8, 32>}, {pipeline_mode = #tpu.pipeline_mode<synchronous>, transform_indices = @transform_1, window_bounds = array<i64: 32, 128>}, {pipeline_mode = #tpu.pipeline_mode<synchronous>, transform_indices = @transform_2, window_bounds = array<i64: 1, 128>}, {transform_indices = @transform_3, window_bounds = array<i64: 128, 128>}, {transform_indices = @transform_4, window_bounds = array<i64: 1, 128>}, {transform_indices = @transform_5, window_bounds = array<i64: 8, 128>}]} {
    %c0_i32 = arith.constant 0 : i32
    %0 = arith.cmpi eq, %arg1, %c0_i32 : i32
    %1 = arith.extui %0 : i1 to i32
    %c0_i32_0 = arith.constant 0 : i32
    %2 = arith.cmpi ne, %1, %c0_i32_0 : i32
    scf.if %2 {
      %c0_8 = arith.constant 0 : index
      %c0_9 = arith.constant 0 : index
      %10 = vector.load %arg2[%c0_8, %c0_9] : memref<8x32xf32, #tpu.memory_space<vmem>>, vector<8x32xf32>
      %11 = arith.truncf %10 : vector<8x32xf32> to vector<8x32xbf16>
      %c0_10 = arith.constant 0 : index
      %c0_11 = arith.constant 0 : index
      %12 = vector.load %arg3[%c0_10, %c0_11] : memref<32x128xbf16, #tpu.memory_space<vmem>>, vector<32x128xbf16>
      %cst_12 = arith.constant dense<0.000000e+00> : vector<8x128xf32>
      %13 = tpu.matmul %11, %12, %cst_12 {dimension_numbers = #tpu.dot_dimension_numbers<[1], [0], [0], [1], [0, 0, 1, 1], [], []>} : vector<8x32xbf16>, vector<32x128xbf16>, vector<8x128xf32> -> vector<8x128xf32>
      %c0_13 = arith.constant 0 : index
      %c0_14 = arith.constant 0 : index
      %14 = vector.load %arg4[%c0_13, %c0_14] : memref<1x128xf32, #tpu.memory_space<vmem>>, vector<1x128xf32>
      %15 = vector.broadcast %14 : vector<1x128xf32> to vector<8x128xf32>
      %16 = arith.addf %13, %15 : vector<8x128xf32>
      %cst_15 = arith.constant 0.000000e+00 : f32
      %17 = vector.broadcast %cst_15 : f32 to vector<8x128xf32>
      %18 = arith.maximumf %16, %17 : vector<8x128xf32>
      %19 = arith.truncf %18 : vector<8x128xf32> to vector<8x128xbf16>
      %c0_16 = arith.constant 0 : index
      %c0_17 = arith.constant 0 : index
      %20 = vector.load %arg8[%c0_16, %c0_17] : memref<8x128xbf16, #tpu.memory_space<vmem>>, vector<8x128xbf16>
      tpu.vector_store %arg8[%c0_16, %c0_17], %19 {strides = array<i32>} : memref<8x128xbf16, #tpu.memory_space<vmem>>, vector<8x128xbf16>,
    } else {
    }
    %c0 = arith.constant 0 : index
    %c0_1 = arith.constant 0 : index
    %3 = vector.load %arg8[%c0, %c0_1] : memref<8x128xbf16, #tpu.memory_space<vmem>>, vector<8x128xbf16>
    %c0_2 = arith.constant 0 : index
    %c0_3 = arith.constant 0 : index
    %4 = vector.load %arg5[%c0_2, %c0_3] : memref<128x128xbf16, #tpu.memory_space<vmem>>, vector<128x128xbf16>
    %cst = arith.constant dense<0.000000e+00> : vector<8x128xf32>
    %5 = tpu.matmul %3, %4, %cst {dimension_numbers = #tpu.dot_dimension_numbers<[1], [0], [0], [1], [0, 0, 1, 1], [], []>} : vector<8x128xbf16>, vector<128x128xbf16>, vector<8x128xf32> -> vector<8x128xf32>
    %c0_4 = arith.constant 0 : index
    %c0_5 = arith.constant 0 : index
    %6 = vector.load %arg6[%c0_4, %c0_5] : memref<1x128xf32, #tpu.memory_space<vmem>>, vector<1x128xf32>
    %7 = vector.broadcast %6 : vector<1x128xf32> to vector<8x128xf32>
    %8 = arith.addf %5, %7 : vector<8x128xf32>
    %c0_6 = arith.constant 0 : index
    %c0_7 = arith.constant 0 : index
    %9 = vector.load %arg7[%c0_6, %c0_7] : memref<8x128xf32, #tpu.memory_space<vmem>>, vector<8x128xf32>
    tpu.vector_store %arg7[%c0_6, %c0_7], %8 {strides = array<i32>} : memref<8x128xf32, #tpu.memory_space<vmem>>, vector<8x128xf32>,
    return
  }
  func.func @transform_0(%arg0: i32, %arg1: i32) -> (i32, i32) {
    %c0_i32 = arith.constant 0 : i32
    %c0_i32_0 = arith.constant 0 : i32
    return %arg0, %c0_i32 : i32, i32
  }
  func.func @transform_1(%arg0: i32, %arg1: i32) -> (i32, i32) {
    %c0_i32 = arith.constant 0 : i32
    %c0_i32_0 = arith.constant 0 : i32
    %c0_i32_1 = arith.constant 0 : i32
    return %c0_i32, %c0_i32_0 : i32, i32
  }
  func.func @transform_2(%arg0: i32, %arg1: i32) -> (i32, i32) {
    %c0_i32 = arith.constant 0 : i32
    %c0_i32_0 = arith.constant 0 : i32
    %c0_i32_1 = arith.constant 0 : i32
    return %c0_i32, %c0_i32_0 : i32, i32
  }
  func.func @transform_3(%arg0: i32, %arg1: i32) -> (i32, i32) {
    %c0_i32 = arith.constant 0 : i32
    %c0_i32_0 = arith.constant 0 : i32
    return %c0_i32, %arg1 : i32, i32
  }
  func.func @transform_4(%arg0: i32, %arg1: i32) -> (i32, i32) {
    %c0_i32 = arith.constant 0 : i32
    %c0_i32_0 = arith.constant 0 : i32
    return %c0_i32, %arg1 : i32, i32
  }
  func.func @transform_5(%arg0: i32, %arg1: i32) -> (i32, i32) {
    %c0_i32 = arith.constant 0 : i32
    return %arg0, %arg1 : i32, i32
  }
}

module attributes {stable_mosaic.version = 11 : i64} {
  func.func @_fused_decoder_kernel(%arg0: i32, %arg1: i32, %arg2: memref<8x32xf32, #tpu.memory_space<vmem>>, %arg3: memref<32x128xbf16, #tpu.memory_space<vmem>>, %arg4: memref<1x128xf32, #tpu.memory_space<vmem>>, %arg5: memref<128x128xbf16, #tpu.memory_space<vmem>>, %arg6: memref<1x128xf32, #tpu.memory_space<vmem>>, %arg7: memref<8x128xf32, #tpu.memory_space<vmem>>, %arg8: memref<8x128xbf16, #tpu.memory_space<vmem>>) attributes {dimension_semantics = [#tpu.dimension_semantics<parallel>, #tpu.dimension_semantics<arbitrary>], iteration_bounds = array<i64: 1, 1>, scalar_prefetch = 0 : i64, scratch_operands = 1 : i64, tpu.core_type = #tpu.core_type<tc>, window_params = [{transform_indices = @transform_0, window_bounds = array<i64: 8, 32>}, {pipeline_mode = #tpu.pipeline_mode<synchronous>, transform_indices = @transform_1, window_bounds = array<i64: 32, 128>}, {pipeline_mode = #tpu.pipeline_mode<synchronous>, transform_indices = @transform_2, window_bounds = array<i64: 1, 128>}, {transform_indices = @transform_3, window_bounds = array<i64: 128, 128>}, {transform_indices = @transform_4, window_bounds = array<i64: 1, 128>}, {transform_indices = @transform_5, window_bounds = array<i64: 8, 128>}]} {
    %c0_i32 = arith.constant 0 : i32
    %0 = arith.cmpi eq, %arg1, %c0_i32 : i32
    %1 = arith.extui %0 : i1 to i32
    %c0_i32_0 = arith.constant 0 : i32
    %2 = arith.cmpi ne, %1, %c0_i32_0 : i32
    scf.if %2 {
      %c0_8 = arith.constant 0 : index
      %c0_9 = arith.constant 0 : index
      %10 = vector.load %arg2[%c0_8, %c0_9] : memref<8x32xf32, #tpu.memory_space<vmem>>, vector<8x32xf32>
      %11 = arith.truncf %10 : vector<8x32xf32> to vector<8x32xbf16>
      %c0_10 = arith.constant 0 : index
      %c0_11 = arith.constant 0 : index
      %12 = vector.load %arg3[%c0_10, %c0_11] : memref<32x128xbf16, #tpu.memory_space<vmem>>, vector<32x128xbf16>
      %cst_12 = arith.constant dense<0.000000e+00> : vector<8x128xf32>
      %13 = tpu.matmul %11, %12, %cst_12 {dimension_numbers = #tpu.dot_dimension_numbers<[1], [0], [0], [1], [0, 0, 1, 1], [], []>} : vector<8x32xbf16>, vector<32x128xbf16>, vector<8x128xf32> -> vector<8x128xf32>
      %c0_13 = arith.constant 0 : index
      %c0_14 = arith.constant 0 : index
      %14 = vector.load %arg4[%c0_13, %c0_14] : memref<1x128xf32, #tpu.memory_space<vmem>>, vector<1x128xf32>
      %15 = vector.broadcast %14 : vector<1x128xf32> to vector<8x128xf32>
      %16 = arith.addf %13, %15 : vector<8x128xf32>
      %cst_15 = arith.constant 0.000000e+00 : f32
      %17 = vector.broadcast %cst_15 : f32 to vector<8x128xf32>
      %18 = arith.maximumf %16, %17 : vector<8x128xf32>
      %19 = arith.truncf %18 : vector<8x128xf32> to vector<8x128xbf16>
      %c0_16 = arith.constant 0 : index
      %c0_17 = arith.constant 0 : index
      %20 = vector.load %arg8[%c0_16, %c0_17] : memref<8x128xbf16, #tpu.memory_space<vmem>>, vector<8x128xbf16>
      tpu.vector_store %arg8[%c0_16, %c0_17], %19 {strides = array<i32>} : memref<8x128xbf16, #tpu.memory_space<vmem>>, vector<8x128xbf16>,
    } else {
    }
    %c0 = arith.constant 0 : index
    %c0_1 = arith.constant 0 : index
    %3 = vector.load %arg8[%c0, %c0_1] : memref<8x128xbf16, #tpu.memory_space<vmem>>, vector<8x128xbf16>
    %c0_2 = arith.constant 0 : index
    %c0_3 = arith.constant 0 : index
    %4 = vector.load %arg5[%c0_2, %c0_3] : memref<128x128xbf16, #tpu.memory_space<vmem>>, vector<128x128xbf16>
    %cst = arith.constant dense<0.000000e+00> : vector<8x128xf32>
    %5 = tpu.matmul %3, %4, %cst {dimension_numbers = #tpu.dot_dimension_numbers<[1], [0], [0], [1], [0, 0, 1, 1], [], []>} : vector<8x128xbf16>, vector<128x128xbf16>, vector<8x128xf32> -> vector<8x128xf32>
    %c0_4 = arith.constant 0 : index
    %c0_5 = arith.constant 0 : index
    %6 = vector.load %arg6[%c0_4, %c0_5] : memref<1x128xf32, #tpu.memory_space<vmem>>, vector<1x128xf32>
    %7 = vector.broadcast %6 : vector<1x128xf32> to vector<8x128xf32>
    %8 = arith.addf %5, %7 : vector<8x128xf32>
    %c0_6 = arith.constant 0 : index
    %c0_7 = arith.constant 0 : index
    %9 = vector.load %arg7[%c0_6, %c0_7] : memref<8x128xf32, #tpu.memory_space<vmem>>, vector<8x128xf32>
    tpu.vector_store %arg7[%c0_6, %c0_7], %8 {strides = array<i32>} : memref<8x128xf32, #tpu.memory_space<vmem>>, vector<8x128xf32>,
    return
  }
  func.func @transform_0(%arg0: i32, %arg1: i32) -> (i32, i32) {
    %c0_i32 = arith.constant 0 : i32
    %c0_i32_0 = arith.constant 0 : i32
    return %arg0, %c0_i32 : i32, i32
  }
  func.func @transform_1(%arg0: i32, %arg1: i32) -> (i32, i32) {
    %c0_i32 = arith.constant 0 : i32
    %c0_i32_0 = arith.constant 0 : i32
    %c0_i32_1 = arith.constant 0 : i32
    return %c0_i32, %c0_i32_0 : i32, i32
  }
  func.func @transform_2(%arg0: i32, %arg1: i32) -> (i32, i32) {
    %c0_i32 = arith.constant 0 : i32
    %c0_i32_0 = arith.constant 0 : i32
    %c0_i32_1 = arith.constant 0 : i32
    return %c0_i32, %c0_i32_0 : i32, i32
  }
  func.func @transform_3(%arg0: i32, %arg1: i32) -> (i32, i32) {
    %c0_i32 = arith.constant 0 : i32
    %c0_i32_0 = arith.constant 0 : i32
    return %c0_i32, %arg1 : i32, i32
  }
  func.func @transform_4(%arg0: i32, %arg1: i32) -> (i32, i32) {
    %c0_i32 = arith.constant 0 : i32
    %c0_i32_0 = arith.constant 0 : i32
    return %c0_i32, %arg1 : i32, i32
  }
  func.func @transform_5(%arg0: i32, %arg1: i32) -> (i32, i32) {
    %c0_i32 = arith.constant 0 : i32
    return %arg0, %arg1 : i32, i32
  }
}

</mosaic_0001>

<llo_original>
// kernel: tpu_custom_call.1
$region0: #{tpu_custom_call.1}
  #allocation0 [shape = 'u32[]', space=smem, size = 0x4, offset = 0x4, fixed_abs, tag = 'smem constant byte address 0x4 - core index']
  #allocation1 [shape = 'u32[144,128]{1,0:T(1,128)}', space=vmem, size = 0x12000, scoped, tag = 'internal scratch']
  #allocation2 [shape = 'bf16[8,128]{1,0:T(8,128)(2,1)}', space=vmem, size = 0x800, scoped, tag = 'scratch operand']
  %s0 = inlined_call_operand.hbm [shape: f32[8,32], index: 0, kind: input, shape index: {}]
  %s1 = inlined_call_operand.hbm [shape: bf16[32,128], index: 1, kind: input, shape index: {}]
  %s2 = inlined_call_operand.vmem [shape: f32[1,128], index: 2, kind: input, shape index: {}]
  %s3 = inlined_call_operand.hbm [shape: bf16[128,128], index: 3, kind: input, shape index: {}]
  %s4 = inlined_call_operand.vmem [shape: f32[1,128], index: 4, kind: input, shape index: {}]
  %s5 = inlined_call_operand.hbm [shape: f32[8,128], index: 5, kind: output, shape index: {}]
  %s6 = sld [smem:[#allocation0]]
  $region46: #{tpu_custom_call.1} parent=0
    _
  %s8 = ssub.s32 1, %s6
  %s9 = scalar_select 0, %s8, %s6
  $region1: #{tpu_custom_call.1} parent=0
    #allocation3 [shape = 'u8[4096]{0}', space=vmem, size = 0x1000, scoped, tag = 'input window, operand 0, single buffered']
    #allocation4 [shape = 's32[1]{0}', space=sflag, size = 0x4, scoped, tag = 'scoped memory for tpu_custom_call.1']
    #allocation5 [shape = 's32[1]{0}', space=sflag, size = 0x4, scoped, tag = 'scoped memory for tpu_custom_call.1']
    #allocation6 [shape = 'u8[8192]{0}', space=vmem, size = 0x2000, scoped, tag = 'input window, operand 1, single buffered']
    #allocation7 [shape = 's32[1]{0}', space=sflag, size = 0x4, scoped, tag = 'scoped memory for tpu_custom_call.1']
    #allocation8 [shape = 'u8[32768]{0}', space=vmem, size = 0x8000, scoped, tag = 'input window, operand 3, single buffered']
    #allocation9 [shape = 'u8[4096]{0}', space=vmem, size = 0x1000, scoped, tag = 'output window, operand 0, single buffered']
    %10 = vsyncpa [#allocation4], 0
    %11 = vsyncpa [#allocation7], 0
    %12 = vsyncpa [#allocation5], 0
    // Predicated region
    $region2: #{tpu_custom_call.1} parent=1 // pred_check
      _
    $region3: #{tpu_custom_call.1} parent=1 // pred_check_branch
      %14 = sbr.rel (0) target = $region5
    $region4: #{tpu_custom_call.1} parent=1 // pred_region
      %s16 = ssub.s32 128, 128
      %17 = vsyncadd [#allocation4], %s16
      %s19 = sshll.u32 [#allocation3], 4
      %s20 = int_to_ptr.vmem [resolvable:$true] %s19
      %22 = dma.hbm_to_vmem [thread:$0]  %s0, 128, %s20, [#allocation4]
    $region5: #{tpu_custom_call.1} parent=1 // pred_fallthru
      _
    // Predicated region
    $region6: #{tpu_custom_call.1} parent=1 // pred_check
      _
    $region7: #{tpu_custom_call.1} parent=1 // pred_check_branch
      %24 = sbr.rel (0) target = $region9
    $region8: #{tpu_custom_call.1} parent=1 // pred_region
      %s26 = ssub.s32 256, 256
      %27 = vsyncadd [#allocation7], %s26
      %s28 = sshll.u32 [#allocation6], 4
      %s29 = int_to_ptr.vmem [resolvable:$true] %s28
      %34 = dma.hbm_to_vmem [thread:$0]  %s1, 256, %s29, [#allocation7], 64, 64, 4
    $region9: #{tpu_custom_call.1} parent=1 // pred_fallthru
      _
    // Predicated region
    $region10: #{tpu_custom_call.1} parent=1 // pred_check
      _
    $region11: #{tpu_custom_call.1} parent=1 // pred_check_branch
      %36 = sbr.rel (0) target = $region13
    $region12: #{tpu_custom_call.1} parent=1 // pred_region
      _
    $region13: #{tpu_custom_call.1} parent=1 // pred_fallthru
      _
    // Predicated region
    $region14: #{tpu_custom_call.1} parent=1 // pred_check
      _
    $region15: #{tpu_custom_call.1} parent=1 // pred_check_branch
      %38 = sbr.rel (0) target = $region17
    $region16: #{tpu_custom_call.1} parent=1 // pred_region
      %s40 = ssub.s32 1024, 1024
      %41 = vsyncadd [#allocation7], %s40
      %s42 = sshll.u32 [#allocation8], 4
      %s43 = int_to_ptr.vmem [resolvable:$true] %s42
      %48 = dma.hbm_to_vmem [thread:$0]  %s3, 1024, %s43, [#allocation7], 64, 64, 4
    $region17: #{tpu_custom_call.1} parent=1 // pred_fallthru
      _
    // Predicated region
    $region18: #{tpu_custom_call.1} parent=1 // pred_check
      _
    $region19: #{tpu_custom_call.1} parent=1 // pred_check_branch
      %50 = sbr.rel (0) target = $region21
    $region20: #{tpu_custom_call.1} parent=1 // pred_region
      _
    $region21: #{tpu_custom_call.1} parent=1 // pred_fallthru
      _
    // Predicated region
    $region22: #{tpu_custom_call.1} parent=1 // pred_check
      _
    $region23: #{tpu_custom_call.1} parent=1 // pred_check_branch
      %52 = sbr.rel (0) target = $region25
    $region24: #{tpu_custom_call.1} parent=1 // pred_region
      %53 = dma.done [#allocation4], 128
    $region25: #{tpu_custom_call.1} parent=1 // pred_fallthru
      _
    // Predicated region
    $region26: #{tpu_custom_call.1} parent=1 // pred_check
      _
    $region27: #{tpu_custom_call.1} parent=1 // pred_check_branch
      %55 = sbr.rel (0) target = $region29
    $region28: #{tpu_custom_call.1} parent=1 // pred_region
      %56 = dma.done [#allocation7], 256
    $region29: #{tpu_custom_call.1} parent=1 // pred_fallthru
      _
    // Predicated region
    $region30: #{tpu_custom_call.1} parent=1 // pred_check
      _
    $region31: #{tpu_custom_call.1} parent=1 // pred_check_branch
      %58 = sbr.rel (0) target = $region33
    $region32: #{tpu_custom_call.1} parent=1 // pred_region
      %59 = dma.done [#allocation7], 1024
    $region33: #{tpu_custom_call.1} parent=1 // pred_fallthru
      _
    %p61 = scmp.eq.s32.totalorder 0, 0
    // Predicated region
    $region34: #{tpu_custom_call.1} parent=1 // pred_check
      %p62 = pneg %p61
    $region35: #{tpu_custom_call.1} parent=1 // pred_check_branch
      %64 = sbr.rel (%p62) target = $region37
    $region36: #{tpu_custom_call.1} parent=1 // pred_region
      %v65 = vld [vmem:[#allocation3] sm:$0xff]
      %v66 = vpack.c.bf16 %v65, %v65
      %v67 = vld [vmem:[#allocation6] sm:$0xf]
      %v68 = vld [vmem:[#allocation6 + $0x4] sm:$0xf]
      %v69 = vld [vmem:[#allocation6 + $0x8] sm:$0xf]
      %v70 = vld [vmem:[#allocation6 + $0xc] sm:$0xf]
      %v71 = vld [vmem:[%s2] sm:$0x1]
      %v73 = vlaneseq
      %v74 = vshrl.u32 %v73, 7
      %v75 = vsub.s32 0, %v74
      %v76 = vrot.slane %v71, %v75
      %v82 = vunpack.c.l.b16 %v67
      %v83 = vunpack.c.l.b16 %v68
      %v84 = vunpack.c.l.b16 %v69
      %v85 = vunpack.c.l.b16 %v70
      %v86 = vpack.c.b16 %v83, %v82
      %v87 = vpack.c.b16 %v85, %v84
      %vm90 = vcmask 261120
      %v92 = vsel %vm90, %v66, 0
      %94 = vmatprep.subr.bf16.mxu0 0
      %95 = vmatpush1.bf16.msra.mxu0 0
      %96 = vmatprep.subr.bf16.mxu0 0
      %97 = vmatpush1.bf16.msra.mxu0 0
      %98 = vmatprep.subr.bf16.mxu0 0
      %99 = vmatpush1.bf16.msra.mxu0 0
      %100 = vmatprep.subr.bf16.mxu0 0
      %101 = vmatpush1.bf16.msra.mxu0 0
      %102 = vmatprep.subr.bf16.mxu0 0
      %103 = vmatpush1.bf16.msra.mxu0 0
      %104 = vmatprep.subr.bf16.mxu0 0
      %105 = vmatpush1.bf16.msra.mxu0 0
      %106 = vmatprep.subr.bf16.mxu0 0
      %107 = vmatpush1.bf16.msra.mxu0 %v87
      %108 = vmatprep.subr.bf16.mxu0 0
      %109 = vmatpush1.bf16.msra.mxu0 %v86
      %110 = vmatprep.subr.bf16.mxu0 0
      %111 = vmatpush2.bf16.msra.mxu0 0
      %112 = vmatprep.subr.bf16.mxu0 0
      %113 = vmatpush2.bf16.msra.mxu0 0
      %114 = vmatprep.subr.bf16.mxu0 0
      %115 = vmatpush2.bf16.msra.mxu0 0
      %116 = vmatprep.subr.bf16.mxu0 0
      %117 = vmatpush2.bf16.msra.mxu0 0
      %118 = vmatprep.subr.bf16.mxu0 0
      %119 = vmatpush2.bf16.msra.mxu0 0
      %120 = vmatprep.subr.bf16.mxu0 0
      %121 = vmatpush2.bf16.msra.mxu0 0
      %122 = vmatprep.subr.bf16.mxu0 0
      %123 = vmatpush2.bf16.msra.mxu0 0
      %124 = vmatprep.subr.bf16.mxu0 0
      %125 = vmatpush2.bf16.msra.mxu0 0
      %126 = vmatprep.mubr.bf16.mxu0 0
      %127 = vmatmul.mubr.bf16.gmra.mxu0 %v92
      %v128 = vpop.f32.mrf.mxu0
      %v129 = vadd.f32 %v76, %v128
      %v130 = vpop.f32.mrf.mxu0
      %v131 = vpop.f32.mrf.mxu0
      %v132 = vpop.f32.mrf.mxu0
      %133 = vdwg.mxu0
      %v134 = vmax.f32 %v129, 0.0
      %v135 = vpack.c.bf16 %v134, %v134
      %136 = vst [vmem:[#allocation2] sm:$0xf] %v135
    $region37: #{tpu_custom_call.1} parent=1 // pred_fallthru
      _
    %v137 = vld [vmem:[#allocation2] sm:$0xf]
    %v138 = vld [vmem:[#allocation8] sm:$0xf]
    %v139 = vld [vmem:[#allocation8 + $0x4] sm:$0xf]
    %v140 = vld [vmem:[#allocation8 + $0x8] sm:$0xf]
    %v141 = vld [vmem:[#allocation8 + $0xc] sm:$0xf]
    %v142 = vld [vmem:[#allocation8 + $0x10] sm:$0xf]
    %v143 = vld [vmem:[#allocation8 + $0x14] sm:$0xf]
    %v144 = vld [vmem:[#allocation8 + $0x18] sm:$0xf]
    %v145 = vld [vmem:[#allocation8 + $0x1c] sm:$0xf]
    %v146 = vld [vmem:[#allocation8 + $0x20] sm:$0xf]
    %v147 = vld [vmem:[#allocation8 + $0x24] sm:$0xf]
    %v148 = vld [vmem:[#allocation8 + $0x28] sm:$0xf]
    %v149 = vld [vmem:[#allocation8 + $0x2c] sm:$0xf]
    %v150 = vld [vmem:[#allocation8 + $0x30] sm:$0xf]
    %v151 = vld [vmem:[#allocation8 + $0x34] sm:$0xf]
    %v152 = vld [vmem:[#allocation8 + $0x38] sm:$0xf]
    %v153 = vld [vmem:[#allocation8 + $0x3c] sm:$0xf]
    %v154 = vld [vmem:[%s4] sm:$0x1]
    %v156 = vlaneseq
    %v157 = vshrl.u32 %v156, 7
    %v158 = vsub.s32 0, %v157
    %v159 = vrot.slane %v154, %v158
    %v177 = vunpack.c.l.b16 %v138
    %v178 = vunpack.c.l.b16 %v139
    %v179 = vunpack.c.l.b16 %v140
    %v180 = vunpack.c.l.b16 %v141
    %v181 = vunpack.c.l.b16 %v142
    %v182 = vunpack.c.l.b16 %v143
    %v183 = vunpack.c.l.b16 %v144
    %v184 = vunpack.c.l.b16 %v145
    %v185 = vunpack.c.l.b16 %v146
    %v186 = vunpack.c.l.b16 %v147
    %v187 = vunpack.c.l.b16 %v148
    %v188 = vunpack.c.l.b16 %v149
    %v189 = vunpack.c.l.b16 %v150
    %v190 = vunpack.c.l.b16 %v151
    %v191 = vunpack.c.l.b16 %v152
    %v192 = vunpack.c.l.b16 %v153
    %v193 = vpack.c.b16 %v178, %v177
    %v194 = vpack.c.b16 %v180, %v179
    %v195 = vpack.c.b16 %v182, %v181
    %v196 = vpack.c.b16 %v184, %v183
    %v197 = vpack.c.b16 %v186, %v185
    %v198 = vpack.c.b16 %v188, %v187
    %v199 = vpack.c.b16 %v190, %v189
    %v200 = vpack.c.b16 %v192, %v191
    %209 = vmatprep.subr.bf16.mxu0 0
    %210 = vmatpush1.bf16.msra.mxu0 %v200
    %211 = vmatprep.subr.bf16.mxu0 0
    %212 = vmatpush1.bf16.msra.mxu0 %v199
    %213 = vmatprep.subr.bf16.mxu0 0
    %214 = vmatpush1.bf16.msra.mxu0 %v198
    %215 = vmatprep.subr.bf16.mxu0 0
    %216 = vmatpush1.bf16.msra.mxu0 %v197
    %217 = vmatprep.subr.bf16.mxu0 0
    %218 = vmatpush1.bf16.msra.mxu0 %v196
    %219 = vmatprep.subr.bf16.mxu0 0
    %220 = vmatpush1.bf16.msra.mxu0 %v195
    %221 = vmatprep.subr.bf16.mxu0 0
    %222 = vmatpush1.bf16.msra.mxu0 %v194
    %223 = vmatprep.subr.bf16.mxu0 0
    %224 = vmatpush1.bf16.msra.mxu0 %v193
    %225 = vmatprep.subr.bf16.mxu0 0
    %226 = vmatpush2.bf16.msra.mxu0 0
    %227 = vmatprep.subr.bf16.mxu0 0
    %228 = vmatpush2.bf16.msra.mxu0 0
    %229 = vmatprep.subr.bf16.mxu0 0
    %230 = vmatpush2.bf16.msra.mxu0 0
    %231 = vmatprep.subr.bf16.mxu0 0
    %232 = vmatpush2.bf16.msra.mxu0 0
    %233 = vmatprep.subr.bf16.mxu0 0
    %234 = vmatpush2.bf16.msra.mxu0 0
    %235 = vmatprep.subr.bf16.mxu0 0
    %236 = vmatpush2.bf16.msra.mxu0 0
    %237 = vmatprep.subr.bf16.mxu0 0
    %238 = vmatpush2.bf16.msra.mxu0 0
    %239 = vmatprep.subr.bf16.mxu0 0
    %240 = vmatpush2.bf16.msra.mxu0 0
    %241 = vmatprep.mubr.bf16.mxu0 0
    %242 = vmatmul.mubr.bf16.gmra.mxu0 %v137
    %v243 = vpop.f32.mrf.mxu0
    %v244 = vadd.f32 %v159, %v243
    %v245 = vpop.f32.mrf.mxu0
    %v246 = vpop.f32.mrf.mxu0
    %v247 = vpop.f32.mrf.mxu0
    %248 = vdwg.mxu0
    %249 = vst [vmem:[#allocation9] sm:$0xff] %v244
    // Predicated region
    $region38: #{tpu_custom_call.1} parent=1 // pred_check
      _
    $region39: #{tpu_custom_call.1} parent=1 // pred_check_branch
      %251 = sbr.rel (0) target = $region41
    $region40: #{tpu_custom_call.1} parent=1 // pred_region
      %s253 = ssub.s32 128, 128
      %254 = vsyncadd [#allocation5], %s253
      %s256 = sshll.u32 [#allocation9], 4
      %s257 = int_to_ptr.vmem [resolvable:$true] %s256
      %259 = dma.vmem_to_hbm [thread:$0]  %s257, 128, %s5, [#allocation5]
    $region41: #{tpu_custom_call.1} parent=1 // pred_fallthru
      _
    // Predicated region
    $region42: #{tpu_custom_call.1} parent=1 // pred_check
      _
    $region43: #{tpu_custom_call.1} parent=1 // pred_check_branch
      %261 = sbr.rel (0) target = $region45
    $region44: #{tpu_custom_call.1} parent=1 // pred_region
      %262 = dma.done [#allocation5], 128
    $region45: #{tpu_custom_call.1} parent=1 // pred_fallthru
      _
    %263 = vsyncpa [#allocation4], 1
    %264 = vsyncpa [#allocation7], 1
    %265 = vsyncpa [#allocation5], 1

// kernel: tpu_custom_call.1
$region0: #{tpu_custom_call.1}
  #allocation0 [shape = 'u32[]', space=smem, size = 0x4, offset = 0x4, fixed_abs, tag = 'smem constant byte address 0x4 - core index']
  #allocation1 [shape = 'u32[144,128]{1,0:T(1,128)}', space=vmem, size = 0x12000, scoped, tag = 'internal scratch']
  #allocation2 [shape = 'bf16[8,128]{1,0:T(8,128)(2,1)}', space=vmem, size = 0x800, scoped, tag = 'scratch operand']
  %s0 = inlined_call_operand.hbm [shape: f32[8,32], index: 0, kind: input, shape index: {}]
  %s1 = inlined_call_operand.hbm [shape: bf16[32,128], index: 1, kind: input, shape index: {}]
  %s2 = inlined_call_operand.vmem [shape: f32[1,128], index: 2, kind: input, shape index: {}]
  %s3 = inlined_call_operand.hbm [shape: bf16[128,128], index: 3, kind: input, shape index: {}]
  %s4 = inlined_call_operand.vmem [shape: f32[1,128], index: 4, kind: input, shape index: {}]
  %s5 = inlined_call_operand.hbm [shape: f32[8,128], index: 5, kind: output, shape index: {}]
  %s6 = sld [smem:[#allocation0]]
  $region46: #{tpu_custom_call.1} parent=0
    _
  %s8 = ssub.s32 1, %s6
  %s9 = scalar_select 0, %s8, %s6
  $region1: #{tpu_custom_call.1} parent=0
    #allocation3 [shape = 'u8[4096]{0}', space=vmem, size = 0x1000, scoped, tag = 'input window, operand 0, single buffered']
    #allocation4 [shape = 's32[1]{0}', space=sflag, size = 0x4, scoped, tag = 'scoped memory for tpu_custom_call.1']
    #allocation5 [shape = 's32[1]{0}', space=sflag, size = 0x4, scoped, tag = 'scoped memory for tpu_custom_call.1']
    #allocation6 [shape = 'u8[8192]{0}', space=vmem, size = 0x2000, scoped, tag = 'input window, operand 1, single buffered']
    #allocation7 [shape = 's32[1]{0}', space=sflag, size = 0x4, scoped, tag = 'scoped memory for tpu_custom_call.1']
    #allocation8 [shape = 'u8[32768]{0}', space=vmem, size = 0x8000, scoped, tag = 'input window, operand 3, single buffered']
    #allocation9 [shape = 'u8[4096]{0}', space=vmem, size = 0x1000, scoped, tag = 'output window, operand 0, single buffered']
    %10 = vsyncpa [#allocation4], 0
    %11 = vsyncpa [#allocation7], 0
    %12 = vsyncpa [#allocation5], 0
    // Predicated region
    $region2: #{tpu_custom_call.1} parent=1 // pred_check
      _
    $region3: #{tpu_custom_call.1} parent=1 // pred_check_branch
      %14 = sbr.rel (0) target = $region5
    $region4: #{tpu_custom_call.1} parent=1 // pred_region
      %s16 = ssub.s32 128, 128
      %17 = vsyncadd [#allocation4], %s16
      %s19 = sshll.u32 [#allocation3], 4
      %s20 = int_to_ptr.vmem [resolvable:$true] %s19
      %22 = dma.hbm_to_vmem [thread:$0]  %s0, 128, %s20, [#allocation4]
    $region5: #{tpu_custom_call.1} parent=1 // pred_fallthru
      _
    // Predicated region
    $region6: #{tpu_custom_call.1} parent=1 // pred_check
      _
    $region7: #{tpu_custom_call.1} parent=1 // pred_check_branch
      %24 = sbr.rel (0) target = $region9
    $region8: #{tpu_custom_call.1} parent=1 // pred_region
      %s26 = ssub.s32 256, 256
      %27 = vsyncadd [#allocation7], %s26
      %s28 = sshll.u32 [#allocation6], 4
      %s29 = int_to_ptr.vmem [resolvable:$true] %s28
      %34 = dma.hbm_to_vmem [thread:$0]  %s1, 256, %s29, [#allocation7], 64, 64, 4
    $region9: #{tpu_custom_call.1} parent=1 // pred_fallthru
      _
    // Predicated region
    $region10: #{tpu_custom_call.1} parent=1 // pred_check
      _
    $region11: #{tpu_custom_call.1} parent=1 // pred_check_branch
      %36 = sbr.rel (0) target = $region13
    $region12: #{tpu_custom_call.1} parent=1 // pred_region
      _
    $region13: #{tpu_custom_call.1} parent=1 // pred_fallthru
      _
    // Predicated region
    $region14: #{tpu_custom_call.1} parent=1 // pred_check
      _
    $region15: #{tpu_custom_call.1} parent=1 // pred_check_branch
      %38 = sbr.rel (0) target = $region17
    $region16: #{tpu_custom_call.1} parent=1 // pred_region
      %s40 = ssub.s32 1024, 1024
      %41 = vsyncadd [#allocation7], %s40
      %s42 = sshll.u32 [#allocation8], 4
      %s43 = int_to_ptr.vmem [resolvable:$true] %s42
      %48 = dma.hbm_to_vmem [thread:$0]  %s3, 1024, %s43, [#allocation7], 64, 64, 4
    $region17: #{tpu_custom_call.1} parent=1 // pred_fallthru
      _
    // Predicated region
    $region18: #{tpu_custom_call.1} parent=1 // pred_check
      _
    $region19: #{tpu_custom_call.1} parent=1 // pred_check_branch
      %50 = sbr.rel (0) target = $region21
    $region20: #{tpu_custom_call.1} parent=1 // pred_region
      _
    $region21: #{tpu_custom_call.1} parent=1 // pred_fallthru
      _
    // Predicated region
    $region22: #{tpu_custom_call.1} parent=1 // pred_check
      _
    $region23: #{tpu_custom_call.1} parent=1 // pred_check_branch
      %52 = sbr.rel (0) target = $region25
    $region24: #{tpu_custom_call.1} parent=1 // pred_region
      %53 = dma.done [#allocation4], 128
    $region25: #{tpu_custom_call.1} parent=1 // pred_fallthru
      _
    // Predicated region
    $region26: #{tpu_custom_call.1} parent=1 // pred_check
      _
    $region27: #{tpu_custom_call.1} parent=1 // pred_check_branch
      %55 = sbr.rel (0) target = $region29
    $region28: #{tpu_custom_call.1} parent=1 // pred_region
      %56 = dma.done [#allocation7], 256
    $region29: #{tpu_custom_call.1} parent=1 // pred_fallthru
      _
    // Predicated region
    $region30: #{tpu_custom_call.1} parent=1 // pred_check
      _
    $region31: #{tpu_custom_call.1} parent=1 // pred_check_branch
      %58 = sbr.rel (0) target = $region33
    $region32: #{tpu_custom_call.1} parent=1 // pred_region
      %59 = dma.done [#allocation7], 1024
    $region33: #{tpu_custom_call.1} parent=1 // pred_fallthru
      _
    %p61 = scmp.eq.s32.totalorder 0, 0
    // Predicated region
    $region34: #{tpu_custom_call.1} parent=1 // pred_check
      %p62 = pneg %p61
    $region35: #{tpu_custom_call.1} parent=1 // pred_check_branch
      %64 = sbr.rel (%p62) target = $region37
    $region36: #{tpu_custom_call.1} parent=1 // pred_region
      %v65 = vld [vmem:[#allocation3] sm:$0xff]
      %v66 = vpack.c.bf16 %v65, %v65
      %v67 = vld [vmem:[#allocation6] sm:$0xf]
      %v68 = vld [vmem:[#allocation6 + $0x4] sm:$0xf]
      %v69 = vld [vmem:[#allocation6 + $0x8] sm:$0xf]
      %v70 = vld [vmem:[#allocation6 + $0xc] sm:$0xf]
      %v71 = vld [vmem:[%s2] sm:$0x1]
      %v73 = vlaneseq
      %v74 = vshrl.u32 %v73, 7
      %v75 = vsub.s32 0, %v74
      %v76 = vrot.slane %v71, %v75
      %v82 = vunpack.c.l.b16 %v67
      %v83 = vunpack.c.l.b16 %v68
      %v84 = vunpack.c.l.b16 %v69
      %v85 = vunpack.c.l.b16 %v70
      %v86 = vpack.c.b16 %v83, %v82
      %v87 = vpack.c.b16 %v85, %v84
      %vm90 = vcmask 261120
      %v92 = vsel %vm90, %v66, 0
      %94 = vmatprep.subr.bf16.mxu0 0
      %95 = vmatpush1.bf16.msra.mxu0 0
      %96 = vmatprep.subr.bf16.mxu0 0
      %97 = vmatpush1.bf16.msra.mxu0 0
      %98 = vmatprep.subr.bf16.mxu0 0
      %99 = vmatpush1.bf16.msra.mxu0 0
      %100 = vmatprep.subr.bf16.mxu0 0
      %101 = vmatpush1.bf16.msra.mxu0 0
      %102 = vmatprep.subr.bf16.mxu0 0
      %103 = vmatpush1.bf16.msra.mxu0 0
      %104 = vmatprep.subr.bf16.mxu0 0
      %105 = vmatpush1.bf16.msra.mxu0 0
      %106 = vmatprep.subr.bf16.mxu0 0
      %107 = vmatpush1.bf16.msra.mxu0 %v87
      %108 = vmatprep.subr.bf16.mxu0 0
      %109 = vmatpush1.bf16.msra.mxu0 %v86
      %110 = vmatprep.subr.bf16.mxu0 0
      %111 = vmatpush2.bf16.msra.mxu0 0
      %112 = vmatprep.subr.bf16.mxu0 0
      %113 = vmatpush2.bf16.msra.mxu0 0
      %114 = vmatprep.subr.bf16.mxu0 0
      %115 = vmatpush2.bf16.msra.mxu0 0
      %116 = vmatprep.subr.bf16.mxu0 0
      %117 = vmatpush2.bf16.msra.mxu0 0
      %118 = vmatprep.subr.bf16.mxu0 0
      %119 = vmatpush2.bf16.msra.mxu0 0
      %120 = vmatprep.subr.bf16.mxu0 0
      %121 = vmatpush2.bf16.msra.mxu0 0
      %122 = vmatprep.subr.bf16.mxu0 0
      %123 = vmatpush2.bf16.msra.mxu0 0
      %124 = vmatprep.subr.bf16.mxu0 0
      %125 = vmatpush2.bf16.msra.mxu0 0
      %126 = vmatprep.mubr.bf16.mxu0 0
      %127 = vmatmul.mubr.bf16.gmra.mxu0 %v92
      %v128 = vpop.f32.mrf.mxu0
      %v129 = vadd.f32 %v76, %v128
      %v130 = vpop.f32.mrf.mxu0
      %v131 = vpop.f32.mrf.mxu0
      %v132 = vpop.f32.mrf.mxu0
      %133 = vdwg.mxu0
      %v134 = vmax.f32 %v129, 0.0
      %v135 = vpack.c.bf16 %v134, %v134
      %136 = vst [vmem:[#allocation2] sm:$0xf] %v135
    $region37: #{tpu_custom_call.1} parent=1 // pred_fallthru
      _
    %v137 = vld [vmem:[#allocation2] sm:$0xf]
    %v138 = vld [vmem:[#allocation8] sm:$0xf]
    %v139 = vld [vmem:[#allocation8 + $0x4] sm:$0xf]
    %v140 = vld [vmem:[#allocation8 + $0x8] sm:$0xf]
    %v141 = vld [vmem:[#allocation8 + $0xc] sm:$0xf]
    %v142 = vld [vmem:[#allocation8 + $0x10] sm:$0xf]
    %v143 = vld [vmem:[#allocation8 + $0x14] sm:$0xf]
    %v144 = vld [vmem:[#allocation8 + $0x18] sm:$0xf]
    %v145 = vld [vmem:[#allocation8 + $0x1c] sm:$0xf]
    %v146 = vld [vmem:[#allocation8 + $0x20] sm:$0xf]
    %v147 = vld [vmem:[#allocation8 + $0x24] sm:$0xf]
    %v148 = vld [vmem:[#allocation8 + $0x28] sm:$0xf]
    %v149 = vld [vmem:[#allocation8 + $0x2c] sm:$0xf]
    %v150 = vld [vmem:[#allocation8 + $0x30] sm:$0xf]
    %v151 = vld [vmem:[#allocation8 + $0x34] sm:$0xf]
    %v152 = vld [vmem:[#allocation8 + $0x38] sm:$0xf]
    %v153 = vld [vmem:[#allocation8 + $0x3c] sm:$0xf]
    %v154 = vld [vmem:[%s4] sm:$0x1]
    %v156 = vlaneseq
    %v157 = vshrl.u32 %v156, 7
    %v158 = vsub.s32 0, %v157
    %v159 = vrot.slane %v154, %v158
    %v177 = vunpack.c.l.b16 %v138
    %v178 = vunpack.c.l.b16 %v139
    %v179 = vunpack.c.l.b16 %v140
    %v180 = vunpack.c.l.b16 %v141
    %v181 = vunpack.c.l.b16 %v142
    %v182 = vunpack.c.l.b16 %v143
    %v183 = vunpack.c.l.b16 %v144
    %v184 = vunpack.c.l.b16 %v145
    %v185 = vunpack.c.l.b16 %v146
    %v186 = vunpack.c.l.b16 %v147
    %v187 = vunpack.c.l.b16 %v148
    %v188 = vunpack.c.l.b16 %v149
    %v189 = vunpack.c.l.b16 %v150
    %v190 = vunpack.c.l.b16 %v151
    %v191 = vunpack.c.l.b16 %v152
    %v192 = vunpack.c.l.b16 %v153
    %v193 = vpack.c.b16 %v178, %v177
    %v194 = vpack.c.b16 %v180, %v179
    %v195 = vpack.c.b16 %v182, %v181
    %v196 = vpack.c.b16 %v184, %v183
    %v197 = vpack.c.b16 %v186, %v185
    %v198 = vpack.c.b16 %v188, %v187
    %v199 = vpack.c.b16 %v190, %v189
    %v200 = vpack.c.b16 %v192, %v191
    %209 = vmatprep.subr.bf16.mxu0 0
    %210 = vmatpush1.bf16.msra.mxu0 %v200
    %211 = vmatprep.subr.bf16.mxu0 0
    %212 = vmatpush1.bf16.msra.mxu0 %v199
    %213 = vmatprep.subr.bf16.mxu0 0
    %214 = vmatpush1.bf16.msra.mxu0 %v198
    %215 = vmatprep.subr.bf16.mxu0 0
    %216 = vmatpush1.bf16.msra.mxu0 %v197
    %217 = vmatprep.subr.bf16.mxu0 0
    %218 = vmatpush1.bf16.msra.mxu0 %v196
    %219 = vmatprep.subr.bf16.mxu0 0
    %220 = vmatpush1.bf16.msra.mxu0 %v195
    %221 = vmatprep.subr.bf16.mxu0 0
    %222 = vmatpush1.bf16.msra.mxu0 %v194
    %223 = vmatprep.subr.bf16.mxu0 0
    %224 = vmatpush1.bf16.msra.mxu0 %v193
    %225 = vmatprep.subr.bf16.mxu0 0
    %226 = vmatpush2.bf16.msra.mxu0 0
    %227 = vmatprep.subr.bf16.mxu0 0
    %228 = vmatpush2.bf16.msra.mxu0 0
    %229 = vmatprep.subr.bf16.mxu0 0
    %230 = vmatpush2.bf16.msra.mxu0 0
    %231 = vmatprep.subr.bf16.mxu0 0
    %232 = vmatpush2.bf16.msra.mxu0 0
    %233 = vmatprep.subr.bf16.mxu0 0
    %234 = vmatpush2.bf16.msra.mxu0 0
    %235 = vmatprep.subr.bf16.mxu0 0
    %236 = vmatpush2.bf16.msra.mxu0 0
    %237 = vmatprep.subr.bf16.mxu0 0
    %238 = vmatpush2.bf16.msra.mxu0 0
    %239 = vmatprep.subr.bf16.mxu0 0
    %240 = vmatpush2.bf16.msra.mxu0 0
    %241 = vmatprep.mubr.bf16.mxu0 0
    %242 = vmatmul.mubr.bf16.gmra.mxu0 %v137
    %v243 = vpop.f32.mrf.mxu0
    %v244 = vadd.f32 %v159, %v243
    %v245 = vpop.f32.mrf.mxu0
    %v246 = vpop.f32.mrf.mxu0
    %v247 = vpop.f32.mrf.mxu0
    %248 = vdwg.mxu0
    %249 = vst [vmem:[#allocation9] sm:$0xff] %v244
    // Predicated region
    $region38: #{tpu_custom_call.1} parent=1 // pred_check
      _
    $region39: #{tpu_custom_call.1} parent=1 // pred_check_branch
      %251 = sbr.rel (0) target = $region41
    $region40: #{tpu_custom_call.1} parent=1 // pred_region
      %s253 = ssub.s32 128, 128
      %254 = vsyncadd [#allocation5], %s253
      %s256 = sshll.u32 [#allocation9], 4
      %s257 = int_to_ptr.vmem [resolvable:$true] %s256
      %259 = dma.vmem_to_hbm [thread:$0]  %s257, 128, %s5, [#allocation5]
    $region41: #{tpu_custom_call.1} parent=1 // pred_fallthru
      _
    // Predicated region
    $region42: #{tpu_custom_call.1} parent=1 // pred_check
      _
    $region43: #{tpu_custom_call.1} parent=1 // pred_check_branch
      %261 = sbr.rel (0) target = $region45
    $region44: #{tpu_custom_call.1} parent=1 // pred_region
      %262 = dma.done [#allocation5], 128
    $region45: #{tpu_custom_call.1} parent=1 // pred_fallthru
      _
    %263 = vsyncpa [#allocation4], 1
    %264 = vsyncpa [#allocation7], 1
    %265 = vsyncpa [#allocation5], 1

</llo_original>
